<compile_context>
chip_gen: v5e
topology: v5e:2x2
jax: 0.10.0
libtpu: 0.0.40
codegen_flags: <defaults>
</compile_context>

<pallas_src>
import jax
import jax.numpy as jnp
from jax.experimental import pallas as pl
from jax.experimental.pallas import tpu as pltpu


# ----------------------------- kernels --------------------------------------
def _logreg_kernel(x_ref, wt_ref, b_ref, o_ref):
    # (TB, D) @ (D, O) on the MXU; bias add + sigmoid epilogue (VPU/EUP).
    z = jnp.dot(x_ref[...], wt_ref[...], preferred_element_type=jnp.float32)
    z = z + b_ref[...].astype(jnp.float32)
    o_ref[...] = jax.nn.sigmoid(z).astype(o_ref.dtype)


def _logreg_kernel_ktiled(x_ref, wt_ref, b_ref, o_ref, acc_ref):
    # Contraction axis tiled: accumulate in f32, epilogue on the last K step.
    k = pl.program_id(1)

    @pl.when(k == 0)
    def _():
        acc_ref[...] = jnp.zeros_like(acc_ref)

    acc_ref[...] += jnp.dot(x_ref[...], wt_ref[...],
                            preferred_element_type=jnp.float32)

    @pl.when(k == pl.num_programs(1) - 1)
    def _():
        z = acc_ref[...] + b_ref[...].astype(jnp.float32)
        o_ref[...] = jax.nn.sigmoid(z).astype(o_ref.dtype)


# ----------------------------- helpers --------------------------------------
def _cdiv(a, b):
    return -(-a // b)


def _round_up(v, m):
    return _cdiv(v, m) * m


def _vmem_capacity_bytes():
    try:
        cap = int(pltpu.get_tpu_info().vmem_capacity_bytes)
        if cap > 0:
            return cap
    except Exception:
        pass
    return 64 * 1024 * 1024  # conservative fallback (v7x-sized)


# ----------------------------- wrapper ---------------------------------------
def logistic_regression(x, w, b, *, max_tb=2048, vmem_budget=None):
    """sigmoid(x @ w.T + b); PyTorch layout: x (B, D), w (O, D), b (O,)."""
    B, D = x.shape
    O = w.shape[0]

    x_elt = jnp.dtype(x.dtype).itemsize
    w_elt = jnp.dtype(w.dtype).itemsize
    sub = {4: 8, 2: 16, 1: 32}.get(x_elt, 8)     # dtype-aware sublane tile

    cap = _vmem_capacity_bytes()
    if vmem_budget is None:
        vmem_budget = int(cap * 0.70)            # leave compiler headroom
    vmem_limit = min(int(cap * 0.90), vmem_budget + (16 << 20))

    # Output lane padding only when it pays off (large, misaligned O).
    pad_o = (O >= 64) and (O % 128 != 0)
    Op = _round_up(O, 128) if pad_o else O

    # Batch tile: >= 4 grid steps when B allows (v7x megacore + pipelining),
    # otherwise a single tile; ~2 MiB of x per step for large B / small D.
    if B >= 4 * sub:
        target_steps = 4
    elif B >= 2 * sub:
        target_steps = 2
    else:
        target_steps = 1
    rows_2mb = _round_up(max(1, (2 << 20) // max(D * x_elt, 1)), sub)
    max_tb = max(max_tb, min(rows_2mb, 8192))
    tb = max(sub, min(max_tb, _round_up(_cdiv(B, target_steps), sub)))

    # Does the whole pre-transposed weight fit residently (double-buffered)?
    resident_w = 2 * (D * Op + Op) * w_elt
    k_tiled = resident_w > vmem_budget // 3

    if not k_tiled:
        # ---------------- simple path: resident weight --------------------
        w_t = w.T                                # (D, O); cacheable by caller
        b2 = b.reshape(1, O)
        if pad_o:
            w_t = jnp.zeros((D, Op), w.dtype).at[:, :O].set(w_t)
            b2 = jnp.zeros((1, Op), b.dtype).at[:, :O].set(b2)

        def fits(t):
            return (2 * t * D * x_elt + 2 * t * Op * x_elt + resident_w
                    <= vmem_budget)

        while tb > sub and not fits(tb):
            tb = max(sub, _round_up(tb // 2, sub))

        out_p = pl.pallas_call(
            _logreg_kernel,
            out_shape=jax.ShapeDtypeStruct((B, Op), x.dtype),
            grid_spec=pltpu.PrefetchScalarGridSpec(
                num_scalar_prefetch=0,
                grid=(_cdiv(B, tb),),
                in_specs=[
                    pl.BlockSpec((tb, D), lambda i: (i, 0)),   # streamed x tiles
                    pl.BlockSpec((D, Op), lambda i: (0, 0)),   # resident weight
                    pl.BlockSpec((1, Op), lambda i: (0, 0)),   # resident bias
                ],
                out_specs=pl.BlockSpec((tb, Op), lambda i: (i, 0)),
            ),
            compiler_params=pltpu.CompilerParams(
                dimension_semantics=("parallel",),             # megacore split
                vmem_limit_bytes=vmem_limit,
            ),
        )(x, w_t, b2)
        return out_p[:, :O] if pad_o else out_p

    # ---------------- K-tiled path: weight streamed over contraction -------
    Op = _round_up(O, 128)                       # lane-dense acc/epilogue
    op_padded = (Op != O)
    # Largest lane-dense K tile whose double-buffered slab uses <= budget/3.
    tk_max = max(128, ((vmem_budget // 3) // max(2 * Op * w_elt, 1)) // 128 * 128)
    tk = None
    for t in range(tk_max, 0, -128):
        if D % t == 0:
            tk = t
            break
    if tk is None:                               # D not a multiple of 128
        tk = tk_max
    Dp = _round_up(D, tk)

    x_p = x if Dp == D else jnp.zeros((B, Dp), x.dtype).at[:, :D].set(x)
    w_t = jnp.zeros((Dp, Op), w.dtype).at[:D, :O].set(w.T)
    b2 = jnp.zeros((1, Op), b.dtype).at[:, :O].set(b.reshape(1, O))

    def fits_kt(t):
        return (2 * t * tk * x_elt               # x tiles
                + 2 * t * Op * x_elt             # out tiles
                + t * Op * 4                     # f32 accumulator
                + 2 * tk * Op * w_elt            # streamed weight slabs
                + 2 * Op * w_elt                 # bias
                <= vmem_budget)

    while tb > sub and not fits_kt(tb):
        tb = max(sub, _round_up(tb // 2, sub))

    out_p = pl.pallas_call(
        _logreg_kernel_ktiled,
        out_shape=jax.ShapeDtypeStruct((B, Op), x.dtype),
        grid_spec=pltpu.PrefetchScalarGridSpec(
            num_scalar_prefetch=0,
            grid=(_cdiv(B, tb), Dp // tk),
            in_specs=[
                pl.BlockSpec((tb, tk), lambda i, k: (i, k)),
                pl.BlockSpec((tk, Op), lambda i, k: (k, 0)),
                pl.BlockSpec((1, Op), lambda i, k: (0, 0)),
            ],
            out_specs=pl.BlockSpec((tb, Op), lambda i, k: (i, 0)),
            scratch_shapes=[pltpu.VMEM((tb, Op), jnp.float32)],
        ),
        compiler_params=pltpu.CompilerParams(
            dimension_semantics=("parallel", "arbitrary"),
            vmem_limit_bytes=vmem_limit,
        ),
    )(x_p, w_t, b2)
    return out_p[:, :O] if op_padded else out_p


# ------------------------------ tests ----------------------------------------
if __name__ == "__main__":
    key = jax.random.PRNGKey(0)

    # Case 1: small shapes matching LogisticRegression(input_dim, output_dim).
    batch, input_dim, output_dim = 8, 32, 4
    kx, kw, kb = jax.random.split(key, 3)
    bound = 1.0 / (input_dim ** 0.5)   # mimic nn.Linear uniform init range
    x = jax.random.normal(kx, (batch, input_dim), dtype=jnp.float32)
    w = jax.random.uniform(kw, (output_dim, input_dim), dtype=jnp.float32,
                           minval=-bound, maxval=bound)
    b = jax.random.uniform(kb, (output_dim,), dtype=jnp.float32,
                           minval=-bound, maxval=bound)
    out = jax.block_until_ready(logistic_regression(x, w, b))
    ref = jax.nn.sigmoid(x @ w.T + b)
    assert out.shape == (batch, output_dim)
    assert jnp.allclose(out, ref, atol=1e-5, rtol=1e-5)

    # Case 2: non-aligned shapes, multi-step batch grid with a masked edge tile
    # (no padding of x, B or O anywhere).
    B2, D2, O2 = 300, 20, 3
    kx2, kw2, kb2 = jax.random.split(jax.random.PRNGKey(1), 3)
    bd2 = 1.0 / (D2 ** 0.5)
    x2 = jax.random.normal(kx2, (B2, D2), dtype=jnp.float32)
    w2 = jax.random.uniform(kw2, (O2, D2), dtype=jnp.float32,
                            minval=-bd2, maxval=bd2)
    b2 = jax.random.uniform(kb2, (O2,), dtype=jnp.float32,
                            minval=-bd2, maxval=bd2)
    out2 = jax.block_until_ready(logistic_regression(x2, w2, b2))
    ref2 = jax.nn.sigmoid(x2 @ w2.T + b2)
    assert out2.shape == (B2, O2)
    assert jnp.allclose(out2, ref2, atol=1e-5, rtol=1e-5)

    # Case 3: force the K-tiled (large-weight) path via a small VMEM budget.
    B3, D3, O3 = 96, 512, 256
    kx3, kw3, kb3 = jax.random.split(jax.random.PRNGKey(2), 3)
    bd3 = 1.0 / (D3 ** 0.5)
    x3 = jax.random.normal(kx3, (B3, D3), dtype=jnp.float32)
    w3 = jax.random.uniform(kw3, (O3, D3), dtype=jnp.float32,
                            minval=-bd3, maxval=bd3)
    b3 = jax.random.uniform(kb3, (O3,), dtype=jnp.float32,
                            minval=-bd3, maxval=bd3)
    out3 = jax.block_until_ready(
        logistic_regression(x3, w3, b3, vmem_budget=2 * 1024 * 1024))
    ref3 = jax.nn.sigmoid(x3 @ w3.T + b3)
    assert out3.shape == (B3, O3)
    assert jnp.allclose(out3, ref3, atol=1e-5, rtol=1e-5)

    print("KERNEL_OK")
</pallas_src>

<mosaic_0001>
module attributes {stable_mosaic.version = 11 : i64} {
  func.func @_logreg_kernel(%arg0: i32, %arg1: memref<8x32xf32, #tpu.memory_space<vmem>>, %arg2: memref<32x4xf32, #tpu.memory_space<vmem>>, %arg3: memref<1x4xf32, #tpu.memory_space<vmem>>, %arg4: memref<8x4xf32, #tpu.memory_space<vmem>>) attributes {dimension_semantics = [#tpu.dimension_semantics<parallel>], iteration_bounds = array<i64: 1>, scalar_prefetch = 0 : i64, scratch_operands = 0 : i64, tpu.core_type = #tpu.core_type<tc>, window_params = [{transform_indices = @transform_0, window_bounds = array<i64: 8, 32>}, {pipeline_mode = #tpu.pipeline_mode<synchronous>, transform_indices = @transform_1, window_bounds = array<i64: 32, 4>}, {pipeline_mode = #tpu.pipeline_mode<synchronous>, transform_indices = @transform_2, window_bounds = array<i64: 1, 4>}, {transform_indices = @transform_3, window_bounds = array<i64: 8, 4>}]} {
    %c0 = arith.constant 0 : index
    %c0_0 = arith.constant 0 : index
    %0 = vector.load %arg1[%c0, %c0_0] : memref<8x32xf32, #tpu.memory_space<vmem>>, vector<8x32xf32>
    %c0_1 = arith.constant 0 : index
    %c0_2 = arith.constant 0 : index
    %1 = vector.load %arg2[%c0_1, %c0_2] : memref<32x4xf32, #tpu.memory_space<vmem>>, vector<32x4xf32>
    %cst = arith.constant dense<0.000000e+00> : vector<8x4xf32>
    %2 = tpu.matmul %0, %1, %cst {dimension_numbers = #tpu.dot_dimension_numbers<[1], [0], [0], [1], [0, 0, 1, 1], [], []>} : vector<8x32xf32>, vector<32x4xf32>, vector<8x4xf32> -> vector<8x4xf32>
    %c0_3 = arith.constant 0 : index
    %c0_4 = arith.constant 0 : index
    %3 = vector.load %arg3[%c0_3, %c0_4] : memref<1x4xf32, #tpu.memory_space<vmem>>, vector<1x4xf32>
    %4 = vector.broadcast %3 : vector<1x4xf32> to vector<8x4xf32>
    %5 = arith.addf %2, %4 : vector<8x4xf32>
    %6 = arith.negf %5 : vector<8x4xf32>
    %7 = math.exp %6 : vector<8x4xf32>
    %cst_5 = arith.constant 1.000000e+00 : f32
    %8 = vector.broadcast %cst_5 : f32 to vector<8x4xf32>
    %9 = arith.addf %8, %7 : vector<8x4xf32>
    %10 = arith.divf %8, %9 : vector<8x4xf32>
    %c0_6 = arith.constant 0 : index
    %c0_7 = arith.constant 0 : index
    %11 = vector.load %arg4[%c0_6, %c0_7] : memref<8x4xf32, #tpu.memory_space<vmem>>, vector<8x4xf32>
    tpu.vector_store %arg4[%c0_6, %c0_7], %10 {strides = array<i32>} : memref<8x4xf32, #tpu.memory_space<vmem>>, vector<8x4xf32>,
    return
  }
  func.func @transform_0(%arg0: i32) -> (i32, i32) {
    %c0_i32 = arith.constant 0 : i32
    %c0_i32_0 = arith.constant 0 : i32
    return %arg0, %c0_i32 : i32, i32
  }
  func.func @transform_1(%arg0: i32) -> (i32, i32) {
    %c0_i32 = arith.constant 0 : i32
    %c0_i32_0 = arith.constant 0 : i32
    %c0_i32_1 = arith.constant 0 : i32
    return %c0_i32, %c0_i32_0 : i32, i32
  }
  func.func @transform_2(%arg0: i32) -> (i32, i32) {
    %c0_i32 = arith.constant 0 : i32
    %c0_i32_0 = arith.constant 0 : i32
    %c0_i32_1 = arith.constant 0 : i32
    return %c0_i32, %c0_i32_0 : i32, i32
  }
  func.func @transform_3(%arg0: i32) -> (i32, i32) {
    %c0_i32 = arith.constant 0 : i32
    %c0_i32_0 = arith.constant 0 : i32
    return %arg0, %c0_i32 : i32, i32
  }
}

</mosaic_0001>

<llo_original>
// kernel: tpu_custom_call.1
$region0: #{tpu_custom_call.1}
  #allocation0 [shape = 'u32[]', space=smem, size = 0x4, offset = 0x4, fixed_abs, tag = 'smem constant byte address 0x4 - core index']
  #allocation1 [shape = 'u32[72,128]{1,0:T(1,128)}', space=vmem, size = 0x9000, scoped, tag = 'internal scratch']
  %s0 = inlined_call_operand.vmem [shape: f32[8,32], index: 0, kind: input, shape index: {}]
  %s1 = inlined_call_operand.vmem [shape: f32[32,4], index: 1, kind: input, shape index: {}]
  %s2 = inlined_call_operand.vmem [shape: f32[1,4], index: 2, kind: input, shape index: {}]
  %s3 = inlined_call_operand.vmem [shape: f32[8,4], index: 3, kind: output, shape index: {}]
  %s4 = sld [smem:[#allocation0]]
  $region22: #{tpu_custom_call.1} parent=0
    _
  %s6 = ssub.s32 1, %s4
  %s7 = scalar_select 0, %s6, %s4
  // Predicated region
  $region2: #{tpu_custom_call.1} parent=0 // pred_check
    _
  $region3: #{tpu_custom_call.1} parent=0 // pred_check_branch
    %9 = sbr.rel (0) target = $region5
  $region4: #{tpu_custom_call.1} parent=0 // pred_region
    _
  $region5: #{tpu_custom_call.1} parent=0 // pred_fallthru
    _
  // Predicated region
  $region6: #{tpu_custom_call.1} parent=0 // pred_check
    _
  $region7: #{tpu_custom_call.1} parent=0 // pred_check_branch
    %11 = sbr.rel (0) target = $region9
  $region8: #{tpu_custom_call.1} parent=0 // pred_region
    _
  $region9: #{tpu_custom_call.1} parent=0 // pred_fallthru
    _
  // Predicated region
  $region10: #{tpu_custom_call.1} parent=0 // pred_check
    _
  $region11: #{tpu_custom_call.1} parent=0 // pred_check_branch
    %13 = sbr.rel (0) target = $region13
  $region12: #{tpu_custom_call.1} parent=0 // pred_region
    _
  $region13: #{tpu_custom_call.1} parent=0 // pred_fallthru
    _
  %v14 = vld [vmem:[%s0] sm:$0xff]
  %v15 = vld [vmem:[%s1] sm:$0xff]
  %v16 = vld [vmem:[%s1 + $0x8] sm:$0xff]
  %v17 = vld [vmem:[%s1 + $0x10] sm:$0xff]
  %v18 = vld [vmem:[%s1 + $0x18] sm:$0xff]
  %v19 = vld [vmem:[%s2] sm:$0x1]
  %v21 = vperm.slane %v19, 0
  %vm23 = vcmask 261120
  %v25 = vsel %vm23, %v14, 0
  %27 = vmatpush.msra.mxu0 0.0
  %28 = vmatpush.msra.mxu0 0.0
  %29 = vmatpush.msra.mxu0 0.0
  %30 = vmatpush.msra.mxu0 0.0
  %31 = vmatpush.msra.mxu0 0.0
  %32 = vmatpush.msra.mxu0 0.0
  %33 = vmatpush.msra.mxu0 0.0
  %34 = vmatpush.msra.mxu0 0.0
  %35 = vmatpush.msra.mxu0 0.0
  %36 = vmatpush.msra.mxu0 0.0
  %37 = vmatpush.msra.mxu0 0.0
  %38 = vmatpush.msra.mxu0 0.0
  %39 = vmatpush.msra.mxu0 %v18
  %40 = vmatpush.msra.mxu0 %v17
  %41 = vmatpush.msra.mxu0 %v16
  %42 = vmatpush.msra.mxu0 %v15
  %43 = vmatmul.f32.gmra.mxu0 %v25
  %v44 = vpop.f32.mrf.mxu0
  %v45 = vadd.f32 %v21, %v44
  %46 = vdwg.mxu0
  %v47 = vxor.u32 %v45, 2147483648
  %v48 = vmul.f32 %v47, 1.442695
  %v49 = vpow.pop %v48
  %v50 = vadd.f32 %v49, 1.0
  %v51 = vrcp.pop %v50
  %v52 = vmul.f32 %v50, %v51
  %v53 = vsub.f32 1.0, %v52
  %v54 = vmul.f32 %v51, %v53
  %v55 = vadd.f32 %v51, %v54
  %vm56 = vweird.f32 %v50
  %vm57 = vweird.f32 %v51
  %vm58 = vmor %vm56, %vm57
  %v59 = vsel %vm58, %v51, %v55
  %v60 = vand.u32 2147483647, %v50
  %vm61 = vcmp.eq.f32.partialorder %v60, 8.507059e+37
  %v62 = vand.u32 %v50, 2147483648
  %v63 = vor.u32 1.1754944e-38, %v62
  %v64 = vsel %vm61, %v63, %v59
  %v65 = vmul.f32 1.0, %v64
  %vm66 = vcmask 31744
  %67 = vst.msk [vmem:[%s3] sm:$0xff] %vm66, %v65
  // Predicated region
  $region14: #{tpu_custom_call.1} parent=0 // pred_check
    _
  $region15: #{tpu_custom_call.1} parent=0 // pred_check_branch
    %69 = sbr.rel (0) target = $region17
  $region16: #{tpu_custom_call.1} parent=0 // pred_region
    _
  $region17: #{tpu_custom_call.1} parent=0 // pred_fallthru
    _
  // Predicated region
  $region18: #{tpu_custom_call.1} parent=0 // pred_check
    _
  $region19: #{tpu_custom_call.1} parent=0 // pred_check_branch
    %71 = sbr.rel (0) target = $region21
  $region20: #{tpu_custom_call.1} parent=0 // pred_region
    _
  $region21: #{tpu_custom_call.1} parent=0 // pred_fallthru
    _

</llo_original>
